<compile_context>
chip_gen: v7x
topology: tpu7x:2x2x1
jax: 0.10.0
libtpu: 0.0.40
codegen_flags: <defaults>
</compile_context>

<pallas_src>
import functools

import jax
import jax.numpy as jnp
from jax.experimental import pallas as pl
from jax.experimental.pallas import tpu as pltpu


# -----------------------------------------------------------------------------
# Pallas kernel: one (Nb, C, TILE_S) slab per grid step.
#   x_ref  : (Nb, C, TILE_S)  input tile (io dtype, e.g. bf16)
#   w1t_ref: (Cmid, C)        block-diagonal conv1 weight (left-multiply layout)
#   b1_ref : (Cmid, 1)        conv1 bias (f32)
#   w2t_ref: (C, Cmid)        block-diagonal conv2 weight
#   b2_ref : (C, 1)           conv2 bias (f32)
#   o_ref  : (Nb, C, TILE_S)  output tile
# -----------------------------------------------------------------------------
def _modulate_kernel(x_ref, w1t_ref, b1_ref, w2t_ref, b2_ref, o_ref, *,
                     apply_gate):
    w1t = w1t_ref[...]
    w2t = w2t_ref[...]
    b1 = b1_ref[...]
    b2 = b2_ref[...]
    # Exact reciprocal when storing f32 (tight numerics); EUP approx otherwise
    # (the bf16 store rounds harder than the approximation anyway).
    approx = jnp.dtype(o_ref.dtype) != jnp.dtype(jnp.float32)
    nb = x_ref.shape[0]
    for b in range(nb):                                   # static, Nb <= 8
        x = x_ref[b]                                      # (C, TS)
        h = jnp.dot(w1t, x, preferred_element_type=jnp.float32)      # (Cmid,TS)
        h = jnp.maximum(h + b1, 0.0)                                  # ReLU, f32
        # Cast back to the weight dtype so the second matmul also rides the
        # native bf16 MXU path when io_dtype is bf16 (no-op for f32).
        y = jnp.dot(w2t, h.astype(w2t.dtype), preferred_element_type=jnp.float32)
        y = y + b2                                                    # (C, TS)
        # sigmoid(y) = 1 / (1 + exp(-y)): exp + reciprocal both live on the EUP.
        sig = pl.reciprocal(1.0 + jnp.exp(-y), approx=approx)
        if apply_gate:
            sig = x.astype(jnp.float32) * sig            # fused SE-style gate
        o_ref[b] = sig.astype(o_ref.dtype)


# -----------------------------------------------------------------------------
# Tiling / VMEM budgeting (all static Python arithmetic).
# -----------------------------------------------------------------------------
def _largest_divisor_leq(n, cap):
    cap = max(1, min(n, cap))
    for d in range(cap, 0, -1):
        if n % d == 0:
            return d
    return 1


def _derive_tiling(N, C, Cmid, HW, bx, bo, *, max_tile=2048,
                   live_budget=12 << 20, max_nb=8):
    """Pick (Nb, tile_s, num_s_tiles) from a VMEM live-buffer budget.

    The 12 MiB budget is safe on every generation (incl. v7x's 64 MiB VMEM per
    TensorCore), so vmem_limit_bytes never has to be clamped below the need.
    """
    assert max_tile % 128 == 0, "max_tile must be a multiple of 128"
    per_lane_io = 2 * C * (bx + bo)            # double-buffered X + Y per lane
    per_lane_tmp = 4 * (C + Cmid)              # f32 intermediates (1 batch elem)
    budget_lanes = max(128, live_budget // (per_lane_io + per_lane_tmp))
    cap = max(128, min(max_tile, (budget_lanes // 128) * 128))

    if HW <= cap:
        tile_s = HW                            # full extent: always legal
    else:
        tile_s = 0
        t = cap
        while t >= 128:                        # largest 128-multiple divisor
            if HW % t == 0:
                tile_s = t
                break
            t -= 128
        if tile_s == 0:                        # no divisor: masked remainder
            tile_s = cap
    num_s = pl.cdiv(HW, tile_s)

    nb_cap = max(1, (live_budget - per_lane_tmp * tile_s) // (per_lane_io * tile_s))
    Nb = _largest_divisor_leq(N, min(int(nb_cap), max_nb))

    # v7x has 2 TensorCores: make sure there are >= 2 parallel grid steps.
    if (N // Nb) * num_s == 1:
        if Nb % 2 == 0:
            Nb //= 2
        elif tile_s % 256 == 0:
            tile_s //= 2
            num_s = pl.cdiv(HW, tile_s)
        # else: a single tiny step -- nothing worth splitting.
    return Nb, tile_s, num_s


def _vmem_limit_bytes(Nb, C, Cmid, tile_s, bx, bo, wbytes):
    io = 2 * Nb * C * tile_s * (bx + bo)               # double-buffered X/Y
    tmp = (C + Cmid) * tile_s * 4                      # f32 intermediates
    wts = 2 * 2 * C * Cmid * wbytes                    # W1T + W2T (2 buffers)
    bias = 2 * 2 * (pl.cdiv(Cmid, 8) * 8 + pl.cdiv(C, 8) * 8) * 128 * 4
    est = io + tmp + wts + bias
    # 2x headroom for compiler scratch; stays within v7x's 64 MiB physical VMEM.
    return int(min(max(2 * est, 32 << 20), 56 << 20))


# -----------------------------------------------------------------------------
# Wrapper: NCHW in, NCHW out.  Only free reshapes + one-time dtype casts.
# -----------------------------------------------------------------------------
@functools.partial(jax.jit, static_argnames=("io_dtype", "apply_gate", "max_tile"))
def modulate_forward(x_nchw, w1t, b1, w2t, b2, *, io_dtype=jnp.bfloat16,
                     apply_gate=False, max_tile=2048):
    """y = sigmoid(conv2(relu(conv1(x))))  [optionally fused: x * y].

    io_dtype  : dtype for HBM-facing X/Y tiles and matmul operands; both
                matmuls always accumulate in f32. bf16 halves HBM traffic.
    apply_gate: fuse the usual downstream `x * sigmoid(...)` multiply into the
                epilogue (X is already in VMEM). Default False to match the
                original module's forward, which returns the sigmoid map.
    """
    N, C, H, W = x_nchw.shape
    HW = H * W
    Cmid = w1t.shape[0]

    io_dtype = jnp.dtype(io_dtype)
    bx = bo = io_dtype.itemsize
    x3 = x_nchw.reshape(N, C, HW).astype(io_dtype)   # reshape free; cast no-op
                                                     # when callers pass io_dtype
    w1t_c = w1t.astype(io_dtype)                     # cast once, not per step
    w2t_c = w2t.astype(io_dtype)
    b1_c = b1.astype(jnp.float32)
    b2_c = b2.astype(jnp.float32)

    Nb, tile_s, num_s = _derive_tiling(N, C, Cmid, HW, bx, bo, max_tile=max_tile)

    kernel = functools.partial(_modulate_kernel, apply_gate=apply_gate)
    cost = pl.CostEstimate(
        flops=4 * N * C * Cmid * HW,                 # two block-diag matmuls
        transcendentals=N * C * HW,                  # one exp per output element
        bytes_accessed=N * C * HW * (bx + bo) + 2 * C * Cmid * bx,
    )

    out = pl.pallas_call(
        kernel,
        out_shape=jax.ShapeDtypeStruct((N, C, HW), io_dtype),
        grid_spec=pltpu.PrefetchScalarGridSpec(
            num_scalar_prefetch=0,
            grid=(N // Nb, num_s),
            in_specs=[
                pl.BlockSpec((Nb, C, tile_s), lambda n, s: (n, 0, s)),   # X
                # Constant-index operands: Pallas skips re-DMA across steps.
                # (pipeline_mode=pl.Buffered(1) would reclaim one buffer each;
                #  omitted since the weights are tiny here.)
                pl.BlockSpec((Cmid, C), lambda n, s: (0, 0)),            # W1T
                pl.BlockSpec((Cmid, 1), lambda n, s: (0, 0)),            # b1
                pl.BlockSpec((C, Cmid), lambda n, s: (0, 0)),            # W2T
                pl.BlockSpec((C, 1), lambda n, s: (0, 0)),               # b2
            ],
            out_specs=pl.BlockSpec((Nb, C, tile_s), lambda n, s: (n, 0, s)),
        ),
        compiler_params=pltpu.CompilerParams(
            dimension_semantics=("parallel", "parallel"),
            vmem_limit_bytes=_vmem_limit_bytes(Nb, C, Cmid, tile_s, bx, bo, bx),
        ),
        cost_estimate=cost,
    )(x3, w1t_c, b1_c, w2t_c, b2_c)

    return out.reshape(N, C, H, W)


# -----------------------------------------------------------------------------
# Parameter setup (glue, plain JAX): block-diagonal channel matrices matching
# nn.Conv2d(kernel_size=1, groups=G) semantics.  Dense block-diag wastes
# (G-1)/G of MXU work but the kernel is HBM-bound, so this is fine.
# -----------------------------------------------------------------------------
def _block_diag(blocks):
    """blocks: (G, a, b) -> (G*a, G*b) block-diagonal matrix."""
    G, a, b = blocks.shape
    out = jnp.zeros((G * a, G * b), blocks.dtype)
    for g in range(G):
        out = out.at[g * a:(g + 1) * a, g * b:(g + 1) * b].set(blocks[g])
    return out


def init_modulate_params(key, channel, num_groups=32, compressions=2,
                         dtype=jnp.float32):
    cmid = channel // compressions
    cg_in = channel // num_groups        # in-channels per group (conv1)
    mg = cmid // num_groups              # out-channels per group (conv1)

    k1, k2 = jax.random.split(key)
    # Kaiming-normal (fan_out, relu) as in init_parameters(); biases = 0.
    std1 = (2.0 / float(cmid)) ** 0.5
    w1g = std1 * jax.random.normal(k1, (num_groups, mg, cg_in), dtype)
    std2 = (2.0 / float(channel)) ** 0.5
    w2g = std2 * jax.random.normal(k2, (num_groups, cg_in, mg), dtype)

    # "Left-multiply" layout: h = W1T @ x, y = W2T @ h (channels on sublanes).
    W1T = _block_diag(w1g)               # (Cmid, C)
    W2T = _block_diag(w2g)               # (C, Cmid)
    b1 = jnp.zeros((cmid, 1), dtype)
    b2 = jnp.zeros((channel, 1), dtype)
    return W1T, b1, W2T, b2


def _reference_forward(x_nchw, w1t, b1, w2t, b2):
    """Pure-JAX f32 reference of the same math (for sanity checking)."""
    N, C, H, W = x_nchw.shape
    x3 = x_nchw.reshape(N, C, H * W)
    h = jnp.maximum(jnp.einsum("mc,ncs->nms", w1t, x3) + b1[None], 0.0)
    y = jax.nn.sigmoid(jnp.einsum("cm,nms->ncs", w2t, h) + b2[None])
    return y.reshape(N, C, H, W)


if __name__ == "__main__":
    # Small config: channel=64, num_groups=8, compressions=2, 16x16 spatial
    # so the spatial lane dimension (H*W=256) is 128-dense.
    N, C, H, W = 2, 64, 16, 16
    num_groups, compressions = 8, 2

    key = jax.random.PRNGKey(0)
    kx, kp = jax.random.split(key)
    x = jax.random.normal(kx, (N, C, H, W), jnp.float32)
    W1T, b1, W2T, b2 = init_modulate_params(kp, C, num_groups, compressions)

    y_ref = _reference_forward(x, W1T, b1, W2T, b2)

    # 1) exact-f32 path (matches the PyTorch module up to f32 rounding).
    y32 = jax.block_until_ready(
        modulate_forward(x, W1T, b1, W2T, b2, io_dtype=jnp.float32))
    assert y32.shape == (N, C, H, W)
    assert jnp.allclose(y32, y_ref, atol=2e-5, rtol=2e-5)

    # 2) default bf16-I/O path (half the HBM traffic; f32 accumulation).
    y16 = jax.block_until_ready(modulate_forward(x, W1T, b1, W2T, b2))
    assert y16.dtype == jnp.bfloat16
    assert jnp.allclose(y16.astype(jnp.float32), y_ref, atol=2e-2, rtol=2e-2)

    # 3) fused gating epilogue (out = x * sigmoid(...)), f32.
    yg = jax.block_until_ready(
        modulate_forward(x, W1T, b1, W2T, b2, io_dtype=jnp.float32,
                         apply_gate=True))
    assert jnp.allclose(yg, x * y_ref, atol=1e-4, rtol=1e-4)

    print("KERNEL_OK")
</pallas_src>

<mosaic_0001>
module attributes {stable_mosaic.version = 11 : i64} {
  func.func @_modulate_kernel(%arg0: i32, %arg1: i32, %arg2: memref<1x64x256xf32, #tpu.memory_space<vmem>>, %arg3: memref<32x64xf32, #tpu.memory_space<vmem>>, %arg4: memref<32x1xf32, #tpu.memory_space<vmem>>, %arg5: memref<64x32xf32, #tpu.memory_space<vmem>>, %arg6: memref<64x1xf32, #tpu.memory_space<vmem>>, %arg7: memref<1x64x256xf32, #tpu.memory_space<vmem>>) attributes {dimension_semantics = [#tpu.dimension_semantics<parallel>, #tpu.dimension_semantics<parallel>], iteration_bounds = array<i64: 2, 1>, scalar_prefetch = 0 : i64, scratch_operands = 0 : i64, tpu.core_type = #tpu.core_type<tc>, window_params = [{transform_indices = @transform_0, window_bounds = array<i64: 1, 64, 256>}, {pipeline_mode = #tpu.pipeline_mode<synchronous>, transform_indices = @transform_1, window_bounds = array<i64: 32, 64>}, {pipeline_mode = #tpu.pipeline_mode<synchronous>, transform_indices = @transform_2, window_bounds = array<i64: 32, 1>}, {pipeline_mode = #tpu.pipeline_mode<synchronous>, transform_indices = @transform_3, window_bounds = array<i64: 64, 32>}, {pipeline_mode = #tpu.pipeline_mode<synchronous>, transform_indices = @transform_4, window_bounds = array<i64: 64, 1>}, {transform_indices = @transform_5, window_bounds = array<i64: 1, 64, 256>}]} {
    %c0 = arith.constant 0 : index
    %c0_0 = arith.constant 0 : index
    %0 = vector.load %arg3[%c0, %c0_0] : memref<32x64xf32, #tpu.memory_space<vmem>>, vector<32x64xf32>
    %c0_1 = arith.constant 0 : index
    %c0_2 = arith.constant 0 : index
    %1 = vector.load %arg5[%c0_1, %c0_2] : memref<64x32xf32, #tpu.memory_space<vmem>>, vector<64x32xf32>
    %c0_3 = arith.constant 0 : index
    %c0_4 = arith.constant 0 : index
    %2 = vector.load %arg4[%c0_3, %c0_4] : memref<32x1xf32, #tpu.memory_space<vmem>>, vector<32x1xf32>
    %c0_5 = arith.constant 0 : index
    %c0_6 = arith.constant 0 : index
    %3 = vector.load %arg6[%c0_5, %c0_6] : memref<64x1xf32, #tpu.memory_space<vmem>>, vector<64x1xf32>
    %c0_7 = arith.constant 0 : index
    %c0_8 = arith.constant 0 : index
    %c0_9 = arith.constant 0 : index
    %4 = vector.load %arg2[%c0_7, %c0_8, %c0_9] : memref<1x64x256xf32, #tpu.memory_space<vmem>>, vector<1x64x256xf32>
    %5 = vector.shape_cast %4 : vector<1x64x256xf32> to vector<64x256xf32>
    %cst = arith.constant dense<0.000000e+00> : vector<32x256xf32>
    %6 = tpu.matmul %0, %5, %cst {dimension_numbers = #tpu.dot_dimension_numbers<[1], [0], [0], [1], [0, 0, 1, 1], [], []>} : vector<32x64xf32>, vector<64x256xf32>, vector<32x256xf32> -> vector<32x256xf32>
    %7 = vector.broadcast %2 : vector<32x1xf32> to vector<32x256xf32>
    %8 = arith.addf %6, %7 : vector<32x256xf32>
    %cst_10 = arith.constant 0.000000e+00 : f32
    %9 = vector.broadcast %cst_10 : f32 to vector<32x256xf32>
    %10 = arith.maximumf %8, %9 : vector<32x256xf32>
    %cst_11 = arith.constant dense<0.000000e+00> : vector<64x256xf32>
    %11 = tpu.matmul %1, %10, %cst_11 {dimension_numbers = #tpu.dot_dimension_numbers<[1], [0], [0], [1], [0, 0, 1, 1], [], []>} : vector<64x32xf32>, vector<32x256xf32>, vector<64x256xf32> -> vector<64x256xf32>
    %12 = vector.broadcast %3 : vector<64x1xf32> to vector<64x256xf32>
    %13 = arith.addf %11, %12 : vector<64x256xf32>
    %cst_12 = arith.constant 0.000000e+00 : f32
    %14 = vector.broadcast %cst_12 : f32 to vector<64x256xf32>
    %15 = arith.subf %14, %13 : vector<64x256xf32>
    %16 = math.exp %15 : vector<64x256xf32>
    %cst_13 = arith.constant 1.000000e+00 : f32
    %17 = vector.broadcast %cst_13 : f32 to vector<64x256xf32>
    %18 = arith.addf %17, %16 : vector<64x256xf32>
    %19 = tpu.reciprocal %18 : vector<64x256xf32> -> vector<64x256xf32>
    %c0_14 = arith.constant 0 : index
    %c0_15 = arith.constant 0 : index
    %c0_16 = arith.constant 0 : index
    %20 = vector.load %arg7[%c0_14, %c0_15, %c0_16] : memref<1x64x256xf32, #tpu.memory_space<vmem>>, vector<1x64x256xf32>
    %21 = vector.shape_cast %20 : vector<1x64x256xf32> to vector<64x256xf32>
    %22 = vector.shape_cast %19 : vector<64x256xf32> to vector<1x64x256xf32>
    tpu.vector_store %arg7[%c0_14, %c0_15, %c0_16], %22 {strides = array<i32>} : memref<1x64x256xf32, #tpu.memory_space<vmem>>, vector<1x64x256xf32>,
    return
  }
  func.func @transform_0(%arg0: i32, %arg1: i32) -> (i32, i32, i32) {
    %c0_i32 = arith.constant 0 : i32
    %c0_i32_0 = arith.constant 0 : i32
    return %arg0, %c0_i32, %arg1 : i32, i32, i32
  }
  func.func @transform_1(%arg0: i32, %arg1: i32) -> (i32, i32) {
    %c0_i32 = arith.constant 0 : i32
    %c0_i32_0 = arith.constant 0 : i32
    %c0_i32_1 = arith.constant 0 : i32
    return %c0_i32, %c0_i32_0 : i32, i32
  }
  func.func @transform_2(%arg0: i32, %arg1: i32) -> (i32, i32) {
    %c0_i32 = arith.constant 0 : i32
    %c0_i32_0 = arith.constant 0 : i32
    %c0_i32_1 = arith.constant 0 : i32
    return %c0_i32, %c0_i32_0 : i32, i32
  }
  func.func @transform_3(%arg0: i32, %arg1: i32) -> (i32, i32) {
    %c0_i32 = arith.constant 0 : i32
    %c0_i32_0 = arith.constant 0 : i32
    %c0_i32_1 = arith.constant 0 : i32
    return %c0_i32, %c0_i32_0 : i32, i32
  }
  func.func @transform_4(%arg0: i32, %arg1: i32) -> (i32, i32) {
    %c0_i32 = arith.constant 0 : i32
    %c0_i32_0 = arith.constant 0 : i32
    %c0_i32_1 = arith.constant 0 : i32
    return %c0_i32, %c0_i32_0 : i32, i32
  }
  func.func @transform_5(%arg0: i32, %arg1: i32) -> (i32, i32, i32) {
    %c0_i32 = arith.constant 0 : i32
    %c0_i32_0 = arith.constant 0 : i32
    return %arg0, %c0_i32, %arg1 : i32, i32, i32
  }
}

</mosaic_0001>

<llo_original>
// kernel: modulate_forward.1
$region0: #{modulate_forward.1}
  #allocation0 [shape = 'u32[]', space=smem, size = 0x4, offset = 0x4, fixed_abs, tag = 'smem constant byte address 0x4 - core index']
  #allocation1 [shape = 'u32[144,128]{1,0:T(1,128)}', space=vmem, size = 0x12000, scoped, tag = 'internal scratch']
  %s0 = inlined_call_operand.vmem [shape: f32[2,64,256], index: 0, kind: input, shape index: {}]
  %s1 = inlined_call_operand.vmem [shape: f32[32,64], index: 1, kind: input, shape index: {}]
  %s2 = inlined_call_operand.vmem [shape: f32[32,1], index: 2, kind: input, shape index: {}]
  %s3 = inlined_call_operand.vmem [shape: f32[64,32], index: 3, kind: input, shape index: {}]
  %s4 = inlined_call_operand.vmem [shape: f32[64,1], index: 4, kind: input, shape index: {}]
  %s5 = inlined_call_operand.vmem [shape: f32[2,64,256], index: 5, kind: output, shape index: {}]
  %s6 = sld [smem:[#allocation0]]
  $region53: #{modulate_forward.1} parent=0
    _
  %s8 = ssub.s32 1, %s6
  %s9 = scalar_select 0, %s8, %s6
  loop: start=0, step=1, limit=4
  $region2: #{modulate_forward.1} parent=0 // loop_pre_header
    _
  $region3: #{modulate_forward.1} parent=0 // loop_header
    %s11 = sphi 0, %s15
    %p12 = scmp.ge.s32.totalorder %s11, 4
    %s18 = sphi 0, %s30
    %s19 = sphi 0, %s26
    %s20 = sphi 0, %s18
    %s21 = sphi 0, %s19
    %s22 = sphi 0, %s20
    %s23 = sphi 0, %s21
    %s35 = sphi 0, %s37
    %s38 = sphi 0, %s35
    %s39 = sphi 0, %s38
    %s55 = sphi 0, %s39
    %s59 = sphi 0, %s59
    %s61 = sphi 0, %s59
    %s62 = sphi 0, %s61
    %s76 = sphi 0, %s62
    %s80 = sphi 0, %s80
    %s82 = sphi 0, %s80
    %s83 = sphi 0, %s82
    %s97 = sphi 0, %s83
    %s101 = sphi 0, %s101
    %s103 = sphi 0, %s101
    %s104 = sphi 0, %s103
    %s118 = sphi 0, %s104
    %s122 = sphi 0, %s122
    %s124 = sphi 0, %s122
    %s125 = sphi 0, %s124
    %s139 = sphi 0, %s125
    %s147 = sphi 0, %s149
    %s150 = sphi 0, %s147
    %s151 = sphi 0, %s150
    %s167 = sphi 0, %s151
  $region4: #{modulate_forward.1} parent=0 // loop_header_branch
    %14 = sbr.rel (%p12) target = $region8
  $region5: #{modulate_forward.1} parent=0 // loop_body
    %s16 = ssub.s32 %s11, 1
    %s17 = ssub.s32 %s11, 2
    %s24 = sadd.s32 1, %s19
    %p25 = scmp.ge.s32.totalorder %s24, 1
    %s26 = scalar_select %p25, 0, %s24
    %s27 = sadd.s32 1, %s18
    %s28 = scalar_select %p25, %s27, %s18
    %p29 = scmp.ge.s32.totalorder %s28, 2
    %s30 = scalar_select %p29, 0, %s28
    %s31 = ssub.s32 %s18, %s30
    %s32 = ssub.s32 %s19, %s26
    %s33 = sor.u32 %s31, %s32
    %p34 = scmp.eq.s32.totalorder %s33, 0
    %s36 = sadd.s32 %s35, 1
    %s37 = scalar_select %p34, %s35, %s36
    %p40 = pneg %p34
    %p41 = scmp.eq.s32.totalorder %s11, 1
    %p42 = por %p40, %p41
    %p43 = scmp.ne.s32.totalorder %s35, %s38
    %p44 = scmp.eq.s32.totalorder %s11, 0
    %p45 = por %p43, %p44
    %p46 = scmp.ne.s32.totalorder %s35, %s38
    %p47 = scmp.eq.s32.totalorder %s16, 1
    %p48 = por %p46, %p47
    %p49 = scmp.ne.s32.totalorder %s38, %s39
    %p50 = scmp.eq.s32.totalorder %s16, 0
    %p51 = por %p49, %p50
    %p52 = scmp.ne.s32.totalorder %s38, %s39
    %p53 = scmp.eq.s32.totalorder %s17, 1
    %p54 = por %p52, %p53
    %p56 = scmp.ne.s32.totalorder %s39, %s55
    %p57 = scmp.eq.s32.totalorder %s17, 0
    %p58 = por %p56, %p57
    %s60 = sadd.s32 %s59, 1
    %p63 = scmp.eq.s32.totalorder %s11, 1
    %p64 = scmp.ne.s32.totalorder %s59, %s61
    %p65 = scmp.eq.s32.totalorder %s11, 0
    %p66 = por %p64, %p65
    %p67 = scmp.ne.s32.totalorder %s59, %s61
    %p68 = scmp.eq.s32.totalorder %s16, 1
    %p69 = por %p67, %p68
    %p70 = scmp.ne.s32.totalorder %s61, %s62
    %p71 = scmp.eq.s32.totalorder %s16, 0
    %p72 = por %p70, %p71
    %p73 = scmp.ne.s32.totalorder %s61, %s62
    %p74 = scmp.eq.s32.totalorder %s17, 1
    %p75 = por %p73, %p74
    %p77 = scmp.ne.s32.totalorder %s62, %s76
    %p78 = scmp.eq.s32.totalorder %s17, 0
    %p79 = por %p77, %p78
    %s81 = sadd.s32 %s80, 1
    %p84 = scmp.eq.s32.totalorder %s11, 1
    %p85 = scmp.ne.s32.totalorder %s80, %s82
    %p86 = scmp.eq.s32.totalorder %s11, 0
    %p87 = por %p85, %p86
    %p88 = scmp.ne.s32.totalorder %s80, %s82
    %p89 = scmp.eq.s32.totalorder %s16, 1
    %p90 = por %p88, %p89
    %p91 = scmp.ne.s32.totalorder %s82, %s83
    %p92 = scmp.eq.s32.totalorder %s16, 0
    %p93 = por %p91, %p92
    %p94 = scmp.ne.s32.totalorder %s82, %s83
    %p95 = scmp.eq.s32.totalorder %s17, 1
    %p96 = por %p94, %p95
    %p98 = scmp.ne.s32.totalorder %s83, %s97
    %p99 = scmp.eq.s32.totalorder %s17, 0
    %p100 = por %p98, %p99
    %s102 = sadd.s32 %s101, 1
    %p105 = scmp.eq.s32.totalorder %s11, 1
    %p106 = scmp.ne.s32.totalorder %s101, %s103
    %p107 = scmp.eq.s32.totalorder %s11, 0
    %p108 = por %p106, %p107
    %p109 = scmp.ne.s32.totalorder %s101, %s103
    %p110 = scmp.eq.s32.totalorder %s16, 1
    %p111 = por %p109, %p110
    %p112 = scmp.ne.s32.totalorder %s103, %s104
    %p113 = scmp.eq.s32.totalorder %s16, 0
    %p114 = por %p112, %p113
    %p115 = scmp.ne.s32.totalorder %s103, %s104
    %p116 = scmp.eq.s32.totalorder %s17, 1
    %p117 = por %p115, %p116
    %p119 = scmp.ne.s32.totalorder %s104, %s118
    %p120 = scmp.eq.s32.totalorder %s17, 0
    %p121 = por %p119, %p120
    %s123 = sadd.s32 %s122, 1
    %p126 = scmp.eq.s32.totalorder %s11, 1
    %p127 = scmp.ne.s32.totalorder %s122, %s124
    %p128 = scmp.eq.s32.totalorder %s11, 0
    %p129 = por %p127, %p128
    %p130 = scmp.ne.s32.totalorder %s122, %s124
    %p131 = scmp.eq.s32.totalorder %s16, 1
    %p132 = por %p130, %p131
    %p133 = scmp.ne.s32.totalorder %s124, %s125
    %p134 = scmp.eq.s32.totalorder %s16, 0
    %p135 = por %p133, %p134
    %p136 = scmp.ne.s32.totalorder %s124, %s125
    %p137 = scmp.eq.s32.totalorder %s17, 1
    %p138 = por %p136, %p137
    %p140 = scmp.ne.s32.totalorder %s125, %s139
    %p141 = scmp.eq.s32.totalorder %s17, 0
    %p142 = por %p140, %p141
    %s143 = ssub.s32 %s18, %s30
    %s144 = ssub.s32 %s19, %s26
    %s145 = sor.u32 %s143, %s144
    %p146 = scmp.eq.s32.totalorder %s145, 0
    %s148 = sadd.s32 %s147, 1
    %s149 = scalar_select %p146, %s147, %s148
    %p152 = pneg %p146
    %p153 = scmp.eq.s32.totalorder %s11, 1
    %p154 = por %p152, %p153
    %p155 = scmp.ne.s32.totalorder %s147, %s150
    %p156 = scmp.eq.s32.totalorder %s11, 0
    %p157 = por %p155, %p156
    %p158 = scmp.ne.s32.totalorder %s147, %s150
    %p159 = scmp.eq.s32.totalorder %s16, 1
    %p160 = por %p158, %p159
    %p161 = scmp.ne.s32.totalorder %s150, %s151
    %p162 = scmp.eq.s32.totalorder %s16, 0
    %p163 = por %p161, %p162
    %p164 = scmp.ne.s32.totalorder %s150, %s151
    %p165 = scmp.eq.s32.totalorder %s17, 1
    %p166 = por %p164, %p165
    %p168 = scmp.ne.s32.totalorder %s151, %s167
    %p169 = scmp.eq.s32.totalorder %s17, 0
    %p170 = por %p168, %p169
    %p171 = scmp.le.s32.totalorder 1, %s11
    %p172 = scmp.lt.s32.totalorder %s11, 3
    %p173 = pnand %p171, %p172
    %p174 = pneg %p173
    // Predicated region
    $region9: #{modulate_forward.1} parent=5 // pred_check
      _
    $region10: #{modulate_forward.1} parent=5 // pred_check_branch
      %176 = sbr.rel (%p173) target = $region12
    $region11: #{modulate_forward.1} parent=5 // pred_region
      %s177 = ssub.s32 %s11, 1
      // Predicated region
      $region13: #{modulate_forward.1} parent=11 // pred_check
        %p178 = pneg %p72
      $region14: #{modulate_forward.1} parent=11 // pred_check_branch
        %180 = sbr.rel (%p178) target = $region16
      $region15: #{modulate_forward.1} parent=11 // pred_region
        _
      $region16: #{modulate_forward.1} parent=11 // pred_fallthru
        _
      // Predicated region
      $region17: #{modulate_forward.1} parent=11 // pred_check
        %p181 = pneg %p93
      $region18: #{modulate_forward.1} parent=11 // pred_check_branch
        %183 = sbr.rel (%p181) target = $region20
      $region19: #{modulate_forward.1} parent=11 // pred_region
        _
      $region20: #{modulate_forward.1} parent=11 // pred_fallthru
        _
      // Predicated region
      $region21: #{modulate_forward.1} parent=11 // pred_check
        %p184 = pneg %p114
      $region22: #{modulate_forward.1} parent=11 // pred_check_branch
        %186 = sbr.rel (%p184) target = $region24
      $region23: #{modulate_forward.1} parent=11 // pred_region
        _
      $region24: #{modulate_forward.1} parent=11 // pred_fallthru
        _
      // Predicated region
      $region25: #{modulate_forward.1} parent=11 // pred_check
        %p187 = pneg %p135
      $region26: #{modulate_forward.1} parent=11 // pred_check_branch
        %189 = sbr.rel (%p187) target = $region28
      $region27: #{modulate_forward.1} parent=11 // pred_region
        _
      $region28: #{modulate_forward.1} parent=11 // pred_fallthru
        _
    $region12: #{modulate_forward.1} parent=5 // pred_fallthru
      _
    %p190 = scmp.lt.s32.totalorder %s11, 2
    // Predicated region
    $region29: #{modulate_forward.1} parent=5 // pred_check
      %p191 = pneg %p190
    $region30: #{modulate_forward.1} parent=5 // pred_check_branch
      %193 = sbr.rel (%p191) target = $region32
    $region31: #{modulate_forward.1} parent=5 // pred_region
      // Predicated region
      $region33: #{modulate_forward.1} parent=31 // pred_check
        %p194 = pneg %p45
      $region34: #{modulate_forward.1} parent=31 // pred_check_branch
        %196 = sbr.rel (%p194) target = $region36
      $region35: #{modulate_forward.1} parent=31 // pred_region
        %s197 = smul.u32 2, %s19
        %p198 = scmp.lt.s32.totalorder %s18, 1
        %s199 = scalar_select %p198, %s18, 1
        %p200 = scmp.lt.s32.totalorder %s197, 1
        %s201 = scalar_select %p200, %s197, 1
        %s202 = smul.addr %s199, 16
        %s203 = sadd.s32 %s201, %s202
        %s204 = smul.addr %s203, 8
        %s205 = scalar_lea.vmem %s0, %s204
        %s206 = smul.u32 2, %s19
      $region36: #{modulate_forward.1} parent=31 // pred_fallthru
        _
    $region32: #{modulate_forward.1} parent=5 // pred_fallthru
      _
    %p207 = scmp.le.s32.totalorder 1, %s11
    %p208 = scmp.lt.s32.totalorder %s11, 3
    %p209 = pnand %p207, %p208
    %p210 = pneg %p209
    // Predicated region
    $region37: #{modulate_forward.1} parent=5 // pred_check
      _
    $region38: #{modulate_forward.1} parent=5 // pred_check_branch
      %212 = sbr.rel (%p209) target = $region40
    $region39: #{modulate_forward.1} parent=5 // pred_region
      %s213 = ssub.s32 %s11, 1
      %s214 = smul.u32 2, %s21
      %p215 = scmp.lt.s32.totalorder %s20, 1
      %s216 = scalar_select %p215, %s20, 1
      %p217 = scmp.lt.s32.totalorder %s214, 1
      %s218 = scalar_select %p217, %s214, 1
      %s219 = smul.addr %s216, 16
      %s220 = sadd.s32 %s218, %s219
      %s221 = smul.addr %s220, 8
      %s222 = scalar_lea.vmem %s0, %s221
      %p223 = pneg %p51
      %p224 = pneg %p48
      %p225 = pneg %p72
      %p226 = pneg %p69
      %p227 = pneg %p93
      %p228 = pneg %p90
      %p229 = pneg %p114
      %p230 = pneg %p111
      %p231 = pneg %p135
      %p232 = pneg %p132
      %p233 = pneg %p163
      %p234 = pneg %p160
      %s235 = smul.u32 2, %s21
      %p236 = scmp.lt.s32.totalorder %s20, 1
      %s237 = scalar_select %p236, %s20, 1
      %p238 = scmp.lt.s32.totalorder %s235, 1
      %s239 = scalar_select %p238, %s235, 1
      %s240 = smul.addr %s237, 16
      %s241 = sadd.s32 %s239, %s240
      %s242 = smul.addr %s241, 8
      %s243 = scalar_lea.vmem %s5, %s242
      %s244 = smul.u32 2, %s21
      %p245 = scmp.lt.s32.totalorder %s20, 1
      %s246 = scalar_select %p245, %s20, 1
      %p247 = scmp.lt.s32.totalorder %s244, 1
      %s248 = scalar_select %p247, %s244, 1
      %s249 = smul.addr %s246, 16
      %s250 = sadd.s32 %s248, %s249
      %s251 = smul.addr %s250, 8
      %s252 = scalar_lea.vmem %s0, %s251
      %s253 = smul.u32 2, %s21
      %s254 = smul.u32 2, %s21
      %p255 = scmp.lt.s32.totalorder %s20, 1
      %s256 = scalar_select %p255, %s20, 1
      %p257 = scmp.lt.s32.totalorder %s254, 1
      %s258 = scalar_select %p257, %s254, 1
      %s259 = smul.addr %s256, 16
      %s260 = sadd.s32 %s258, %s259
      %s261 = smul.addr %s260, 8
      %s262 = scalar_lea.vmem %s5, %s261
      %s263 = smul.u32 2, %s21
      %v264 = vld [vmem:[%s1] sm:$0xff]
      %v265 = vld [vmem:[%s1 + $0x8] sm:$0xff]
      %v266 = vld [vmem:[%s1 + $0x10] sm:$0xff]
      %v267 = vld [vmem:[%s1 + $0x18] sm:$0xff]
      %v268 = vld [vmem:[%s3] sm:$0xff]
      %v269 = vld [vmem:[%s3 + $0x8] sm:$0xff]
      %v270 = vld [vmem:[%s3 + $0x10] sm:$0xff]
      %v271 = vld [vmem:[%s3 + $0x18] sm:$0xff]
      %v272 = vld [vmem:[%s3 + $0x20] sm:$0xff]
      %v273 = vld [vmem:[%s3 + $0x28] sm:$0xff]
      %v274 = vld [vmem:[%s3 + $0x30] sm:$0xff]
      %v275 = vld [vmem:[%s3 + $0x38] sm:$0xff]
      %v276 = vld [vmem:[%s2] sm:$0xff]
      %v277 = vld [vmem:[%s2 + $0x8] sm:$0xff]
      %v278 = vld [vmem:[%s2 + $0x10] sm:$0xff]
      %v279 = vld [vmem:[%s2 + $0x18] sm:$0xff]
      %v280 = vld [vmem:[%s4] sm:$0xff]
      %v281 = vld [vmem:[%s4 + $0x8] sm:$0xff]
      %v282 = vld [vmem:[%s4 + $0x10] sm:$0xff]
      %v283 = vld [vmem:[%s4 + $0x18] sm:$0xff]
      %v284 = vld [vmem:[%s4 + $0x20] sm:$0xff]
      %v285 = vld [vmem:[%s4 + $0x28] sm:$0xff]
      %v286 = vld [vmem:[%s4 + $0x30] sm:$0xff]
      %v287 = vld [vmem:[%s4 + $0x38] sm:$0xff]
      %v288 = vld [vmem:[%s252] sm:$0xff]
      %v289 = vld [vmem:[%s252 + $0x8] sm:$0xff]
      %v290 = vld [vmem:[%s252 + $0x10] sm:$0xff]
      %v291 = vld [vmem:[%s252 + $0x18] sm:$0xff]
      %v292 = vld [vmem:[%s252 + $0x20] sm:$0xff]
      %v293 = vld [vmem:[%s252 + $0x28] sm:$0xff]
      %v294 = vld [vmem:[%s252 + $0x30] sm:$0xff]
      %v295 = vld [vmem:[%s252 + $0x38] sm:$0xff]
      %v296 = vld [vmem:[%s252 + $0x40] sm:$0xff]
      %v297 = vld [vmem:[%s252 + $0x48] sm:$0xff]
      %v298 = vld [vmem:[%s252 + $0x50] sm:$0xff]
      %v299 = vld [vmem:[%s252 + $0x58] sm:$0xff]
      %v300 = vld [vmem:[%s252 + $0x60] sm:$0xff]
      %v301 = vld [vmem:[%s252 + $0x68] sm:$0xff]
      %v302 = vld [vmem:[%s252 + $0x70] sm:$0xff]
      %v303 = vld [vmem:[%s252 + $0x78] sm:$0xff]
      %305 = vset.pattern.permute.xlu0 0
      %306 = vperm.xlu0 %305, %v276
      %v307 = vpop.permute.xlu0 %306
      %310 = vset.pattern.permute.xlu0 0
      %311 = vperm.xlu0 %310, %v277
      %v312 = vpop.permute.xlu0 %311
      %315 = vset.pattern.permute.xlu0 0
      %316 = vperm.xlu0 %315, %v278
      %v317 = vpop.permute.xlu0 %316
      %320 = vset.pattern.permute.xlu0 0
      %321 = vperm.xlu0 %320, %v279
      %v322 = vpop.permute.xlu0 %321
      %vm324 = vcmask 523264
      %v326 = vsel %vm324, %v264, 0
      %v329 = vsel %vm324, %v265, 0
      %v332 = vsel %vm324, %v266, 0
      %v335 = vsel %vm324, %v267, 0
      %337 = vmatprep.subr.mxu0 %v289
      %338 = vmatpush1.msra.mxu0 %v288
      %339 = vmatprep.subr.mxu0 %v291
      %340 = vmatpush1.msra.mxu0 %v290
      %341 = vmatprep.subr.mxu0 %v293
      %342 = vmatpush1.msra.mxu0 %v292
      %343 = vmatprep.subr.mxu0 %v295
      %344 = vmatpush1.msra.mxu0 %v294
      %345 = vmatprep.subr.mxu0 %v297
      %346 = vmatpush1.msra.mxu0 %v296
      %347 = vmatprep.subr.mxu0 %v299
      %348 = vmatpush1.msra.mxu0 %v298
      %349 = vmatprep.subr.mxu0 %v301
      %350 = vmatpush1.msra.mxu0 %v300
      %351 = vmatprep.subr.mxu0 %v303
      %352 = vmatpush1.msra.mxu0 %v302
      %353 = vmatprep.subr.mxu0 0.0
      %354 = vmatpush1.msra.mxu0 0.0
      %355 = vmatprep.subr.mxu0 0.0
      %356 = vmatpush1.msra.mxu0 0.0
      %357 = vmatprep.subr.mxu0 0.0
      %358 = vmatpush1.msra.mxu0 0.0
      %359 = vmatprep.subr.mxu0 0.0
      %360 = vmatpush1.msra.mxu0 0.0
      %361 = vmatprep.subr.mxu0 0.0
      %362 = vmatpush1.msra.mxu0 0.0
      %363 = vmatprep.subr.mxu0 0.0
      %364 = vmatpush1.msra.mxu0 0.0
      %365 = vmatprep.subr.mxu0 0.0
      %366 = vmatpush1.msra.mxu0 0.0
      %367 = vmatprep.subr.mxu0 0.0
      %368 = vmatpush1.msra.mxu0 0.0
      %369 = vmatprep.subr.mxu0 0.0
      %370 = vmatpush1.msra.mxu0 0.0
      %371 = vmatprep.subr.mxu0 0.0
      %372 = vmatpush1.msra.mxu0 0.0
      %373 = vmatprep.subr.mxu0 0.0
      %374 = vmatpush1.msra.mxu0 0.0
      %375 = vmatprep.subr.mxu0 0.0
      %376 = vmatpush1.msra.mxu0 0.0
      %377 = vmatprep.subr.mxu0 0.0
      %378 = vmatpush1.msra.mxu0 0.0
      %379 = vmatprep.subr.mxu0 0.0
      %380 = vmatpush1.msra.mxu0 0.0
      %381 = vmatprep.subr.mxu0 0.0
      %382 = vmatpush1.msra.mxu0 0.0
      %383 = vmatprep.subr.mxu0 0.0
      %384 = vmatpush1.msra.mxu0 0.0
      %385 = vmatprep.subr.mxu0 0.0
      %386 = vmatpush1.msra.mxu0 0.0
      %387 = vmatprep.subr.mxu0 0.0
      %388 = vmatpush1.msra.mxu0 0.0
      %389 = vmatprep.subr.mxu0 0.0
      %390 = vmatpush1.msra.mxu0 0.0
      %391 = vmatprep.subr.mxu0 0.0
      %392 = vmatpush1.msra.mxu0 0.0
      %393 = vmatprep.subr.mxu0 0.0
      %394 = vmatpush1.msra.mxu0 0.0
      %395 = vmatprep.subr.mxu0 0.0
      %396 = vmatpush1.msra.mxu0 0.0
      %397 = vmatprep.subr.mxu0 0.0
      %398 = vmatpush1.msra.mxu0 0.0
      %399 = vmatprep.subr.mxu0 0.0
      %400 = vmatpush1.msra.mxu0 0.0
      %401 = vmatprep.mubr.f32.mxu0 0.0
      %402 = vmatmul.mubr.f32.gmra.mrb[0].mxu0 %v326
      %v403 = vpop.f32.mrb[0].mxu0
      %v404 = vadd.f32 %v307, %v403
      %v405 = vpop.f32.mrb[0].mxu0
      %v406 = vadd.f32 %v307, %v405
      %407 = vmatprep.mubr.f32.mxu0 0.0
      %408 = vmatmul.mubr.f32.gmra.mrb[0].mxu0 %v329
      %v409 = vpop.f32.mrb[0].mxu0
      %v410 = vadd.f32 %v312, %v409
      %v411 = vpop.f32.mrb[0].mxu0
      %v412 = vadd.f32 %v312, %v411
      %413 = vmatprep.mubr.f32.mxu0 0.0
      %414 = vmatmul.mubr.f32.gmra.mrb[0].mxu0 %v332
      %v415 = vpop.f32.mrb[0].mxu0
      %v416 = vadd.f32 %v317, %v415
      %v417 = vpop.f32.mrb[0].mxu0
      %v418 = vadd.f32 %v317, %v417
      %419 = vmatprep.mubr.f32.mxu0 0.0
      %420 = vmatmul.mubr.f32.gmra.mrb[0].mxu0 %v335
      %v421 = vpop.f32.mrb[0].mxu0
      %v422 = vadd.f32 %v322, %v421
      %v423 = vpop.f32.mrb[0].mxu0
      %v424 = vadd.f32 %v322, %v423
      %425 = vdwg.mxu0
      %v426 = vmax.f32 %v404, 0.0
      %v427 = vmax.f32 %v406, 0.0
      %v428 = vmax.f32 %v410, 0.0
      %v429 = vmax.f32 %v412, 0.0
      %v430 = vmax.f32 %v416, 0.0
      %v431 = vmax.f32 %v418, 0.0
      %v432 = vmax.f32 %v422, 0.0
      %v433 = vmax.f32 %v424, 0.0
      %435 = vset.pattern.permute.xlu0 0
      %436 = vperm.xlu0 %435, %v280
      %v437 = vpop.permute.xlu0 %436
      %440 = vset.pattern.permute.xlu0 0
      %441 = vperm.xlu0 %440, %v281
      %v442 = vpop.permute.xlu0 %441
      %445 = vset.pattern.permute.xlu0 0
      %446 = vperm.xlu0 %445, %v282
      %v447 = vpop.permute.xlu0 %446
      %450 = vset.pattern.permute.xlu0 0
      %451 = vperm.xlu0 %450, %v283
      %v452 = vpop.permute.xlu0 %451
      %455 = vset.pattern.permute.xlu0 0
      %456 = vperm.xlu0 %455, %v284
      %v457 = vpop.permute.xlu0 %456
      %460 = vset.pattern.permute.xlu0 0
      %461 = vperm.xlu0 %460, %v285
      %v462 = vpop.permute.xlu0 %461
      %465 = vset.pattern.permute.xlu0 0
      %466 = vperm.xlu0 %465, %v286
      %v467 = vpop.permute.xlu0 %466
      %470 = vset.pattern.permute.xlu0 0
      %471 = vperm.xlu0 %470, %v287
      %v472 = vpop.permute.xlu0 %471
      %vm474 = vcmask 261120
      %v476 = vsel %vm474, %v268, 0
      %v479 = vsel %vm474, %v269, 0
      %v482 = vsel %vm474, %v270, 0
      %v485 = vsel %vm474, %v271, 0
      %v488 = vsel %vm474, %v272, 0
      %v491 = vsel %vm474, %v273, 0
      %v494 = vsel %vm474, %v274, 0
      %v497 = vsel %vm474, %v275, 0
      %499 = vmatprep.subr.mxu0 %v427
      %500 = vmatpush1.msra.mxu0 %v426
      %501 = vmatprep.subr.mxu0 %v429
      %502 = vmatpush1.msra.mxu0 %v428
      %503 = vmatprep.subr.mxu0 %v431
      %504 = vmatpush1.msra.mxu0 %v430
      %505 = vmatprep.subr.mxu0 %v433
      %506 = vmatpush1.msra.mxu0 %v432
      %507 = vmatprep.subr.mxu0 0.0
      %508 = vmatpush1.msra.mxu0 0.0
      %509 = vmatprep.subr.mxu0 0.0
      %510 = vmatpush1.msra.mxu0 0.0
      %511 = vmatprep.subr.mxu0 0.0
      %512 = vmatpush1.msra.mxu0 0.0
      %513 = vmatprep.subr.mxu0 0.0
      %514 = vmatpush1.msra.mxu0 0.0
      %515 = vmatprep.subr.mxu0 0.0
      %516 = vmatpush1.msra.mxu0 0.0
      %517 = vmatprep.subr.mxu0 0.0
      %518 = vmatpush1.msra.mxu0 0.0
      %519 = vmatprep.subr.mxu0 0.0
      %520 = vmatpush1.msra.mxu0 0.0
      %521 = vmatprep.subr.mxu0 0.0
      %522 = vmatpush1.msra.mxu0 0.0
      %523 = vmatprep.subr.mxu0 0.0
      %524 = vmatpush1.msra.mxu0 0.0
      %525 = vmatprep.subr.mxu0 0.0
      %526 = vmatpush1.msra.mxu0 0.0
      %527 = vmatprep.subr.mxu0 0.0
      %528 = vmatpush1.msra.mxu0 0.0
      %529 = vmatprep.subr.mxu0 0.0
      %530 = vmatpush1.msra.mxu0 0.0
      %531 = vmatprep.subr.mxu0 0.0
      %532 = vmatpush1.msra.mxu0 0.0
      %533 = vmatprep.subr.mxu0 0.0
      %534 = vmatpush1.msra.mxu0 0.0
      %535 = vmatprep.subr.mxu0 0.0
      %536 = vmatpush1.msra.mxu0 0.0
      %537 = vmatprep.subr.mxu0 0.0
      %538 = vmatpush1.msra.mxu0 0.0
      %539 = vmatprep.subr.mxu0 0.0
      %540 = vmatpush1.msra.mxu0 0.0
      %541 = vmatprep.subr.mxu0 0.0
      %542 = vmatpush1.msra.mxu0 0.0
      %543 = vmatprep.subr.mxu0 0.0
      %544 = vmatpush1.msra.mxu0 0.0
      %545 = vmatprep.subr.mxu0 0.0
      %546 = vmatpush1.msra.mxu0 0.0
      %547 = vmatprep.subr.mxu0 0.0
      %548 = vmatpush1.msra.mxu0 0.0
      %549 = vmatprep.subr.mxu0 0.0
      %550 = vmatpush1.msra.mxu0 0.0
      %551 = vmatprep.subr.mxu0 0.0
      %552 = vmatpush1.msra.mxu0 0.0
      %553 = vmatprep.subr.mxu0 0.0
      %554 = vmatpush1.msra.mxu0 0.0
      %555 = vmatprep.subr.mxu0 0.0
      %556 = vmatpush1.msra.mxu0 0.0
      %557 = vmatprep.subr.mxu0 0.0
      %558 = vmatpush1.msra.mxu0 0.0
      %559 = vmatprep.subr.mxu0 0.0
      %560 = vmatpush1.msra.mxu0 0.0
      %561 = vmatprep.subr.mxu0 0.0
      %562 = vmatpush1.msra.mxu0 0.0
      %563 = vmatprep.mubr.f32.mxu0 0.0
      %564 = vmatmul.mubr.f32.gmra.mrb[0].mxu0 %v476
      %v565 = vpop.f32.mrb[0].mxu0
      %v566 = vadd.f32 %v437, %v565
      %v567 = vpop.f32.mrb[0].mxu0
      %v568 = vadd.f32 %v437, %v567
      %569 = vmatprep.mubr.f32.mxu0 0.0
      %570 = vmatmul.mubr.f32.gmra.mrb[0].mxu0 %v479
      %v571 = vpop.f32.mrb[0].mxu0
      %v572 = vadd.f32 %v442, %v571
      %v573 = vpop.f32.mrb[0].mxu0
      %v574 = vadd.f32 %v442, %v573
      %575 = vmatprep.mubr.f32.mxu0 0.0
      %576 = vmatmul.mubr.f32.gmra.mrb[0].mxu0 %v482
      %v577 = vpop.f32.mrb[0].mxu0
      %v578 = vadd.f32 %v447, %v577
      %v579 = vpop.f32.mrb[0].mxu0
      %v580 = vadd.f32 %v447, %v579
      %581 = vmatprep.mubr.f32.mxu0 0.0
      %582 = vmatmul.mubr.f32.gmra.mrb[0].mxu0 %v485
      %v583 = vpop.f32.mrb[0].mxu0
      %v584 = vadd.f32 %v452, %v583
      %v585 = vpop.f32.mrb[0].mxu0
      %v586 = vadd.f32 %v452, %v585
      %587 = vmatprep.mubr.f32.mxu0 0.0
      %588 = vmatmul.mubr.f32.gmra.mrb[0].mxu0 %v488
      %v589 = vpop.f32.mrb[0].mxu0
      %v590 = vadd.f32 %v457, %v589
      %v591 = vpop.f32.mrb[0].mxu0
      %v592 = vadd.f32 %v457, %v591
      %593 = vmatprep.mubr.f32.mxu0 0.0
      %594 = vmatmul.mubr.f32.gmra.mrb[0].mxu0 %v491
      %v595 = vpop.f32.mrb[0].mxu0
      %v596 = vadd.f32 %v462, %v595
      %v597 = vpop.f32.mrb[0].mxu0
      %v598 = vadd.f32 %v462, %v597
      %599 = vmatprep.mubr.f32.mxu0 0.0
      %600 = vmatmul.mubr.f32.gmra.mrb[0].mxu0 %v494
      %v601 = vpop.f32.mrb[0].mxu0
      %v602 = vadd.f32 %v467, %v601
      %v603 = vpop.f32.mrb[0].mxu0
      %v604 = vadd.f32 %v467, %v603
      %605 = vmatprep.mubr.f32.mxu0 0.0
      %606 = vmatmul.mubr.f32.gmra.mrb[0].mxu0 %v497
      %v607 = vpop.f32.mrb[0].mxu0
      %v608 = vadd.f32 %v472, %v607
      %v609 = vpop.f32.mrb[0].mxu0
      %v610 = vadd.f32 %v472, %v609
      %611 = vdwg.mxu0
      %v612 = vsub.f32 0.0, %v566
      %v613 = vsub.f32 0.0, %v568
      %v614 = vsub.f32 0.0, %v572
      %v615 = vsub.f32 0.0, %v574
      %v616 = vsub.f32 0.0, %v578
      %v617 = vsub.f32 0.0, %v580
      %v618 = vsub.f32 0.0, %v584
      %v619 = vsub.f32 0.0, %v586
      %v620 = vsub.f32 0.0, %v590
      %v621 = vsub.f32 0.0, %v592
      %v622 = vsub.f32 0.0, %v596
      %v623 = vsub.f32 0.0, %v598
      %v624 = vsub.f32 0.0, %v602
      %v625 = vsub.f32 0.0, %v604
      %v626 = vsub.f32 0.0, %v608
      %v627 = vsub.f32 0.0, %v610
      %v628 = vmul.f32 %v612, 1.442695
      %v629 = vpow.pop %v628
      %v630 = vmul.f32 %v613, 1.442695
      %v631 = vpow.pop %v630
      %v632 = vmul.f32 %v614, 1.442695
      %v633 = vpow.pop %v632
      %v634 = vmul.f32 %v615, 1.442695
      %v635 = vpow.pop %v634
      %v636 = vmul.f32 %v616, 1.442695
      %v637 = vpow.pop %v636
      %v638 = vmul.f32 %v617, 1.442695
      %v639 = vpow.pop %v638
      %v640 = vmul.f32 %v618, 1.442695
      %v641 = vpow.pop %v640
      %v642 = vmul.f32 %v619, 1.442695
      %v643 = vpow.pop %v642
      %v644 = vmul.f32 %v620, 1.442695
      %v645 = vpow.pop %v644
      %v646 = vmul.f32 %v621, 1.442695
      %v647 = vpow.pop %v646
      %v648 = vmul.f32 %v622, 1.442695
      %v649 = vpow.pop %v648
      %v650 = vmul.f32 %v623, 1.442695
      %v651 = vpow.pop %v650
      %v652 = vmul.f32 %v624, 1.442695
      %v653 = vpow.pop %v652
      %v654 = vmul.f32 %v625, 1.442695
      %v655 = vpow.pop %v654
      %v656 = vmul.f32 %v626, 1.442695
      %v657 = vpow.pop %v656
      %v658 = vmul.f32 %v627, 1.442695
      %v659 = vpow.pop %v658
      %v660 = vadd.f32 %v629, 1.0
      %v661 = vadd.f32 %v631, 1.0
      %v662 = vadd.f32 %v633, 1.0
      %v663 = vadd.f32 %v635, 1.0
      %v664 = vadd.f32 %v637, 1.0
      %v665 = vadd.f32 %v639, 1.0
      %v666 = vadd.f32 %v641, 1.0
      %v667 = vadd.f32 %v643, 1.0
      %v668 = vadd.f32 %v645, 1.0
      %v669 = vadd.f32 %v647, 1.0
      %v670 = vadd.f32 %v649, 1.0
      %v671 = vadd.f32 %v651, 1.0
      %v672 = vadd.f32 %v653, 1.0
      %v673 = vadd.f32 %v655, 1.0
      %v674 = vadd.f32 %v657, 1.0
      %v675 = vadd.f32 %v659, 1.0
      %v676 = vrcp.pop %v660
      %v677 = vrcp.pop %v661
      %v678 = vrcp.pop %v662
      %v679 = vrcp.pop %v663
      %v680 = vrcp.pop %v664
      %v681 = vrcp.pop %v665
      %v682 = vrcp.pop %v666
      %v683 = vrcp.pop %v667
      %v684 = vrcp.pop %v668
      %v685 = vrcp.pop %v669
      %v686 = vrcp.pop %v670
      %v687 = vrcp.pop %v671
      %v688 = vrcp.pop %v672
      %v689 = vrcp.pop %v673
      %v690 = vrcp.pop %v674
      %v691 = vrcp.pop %v675
      %692 = vst [vmem:[%s262] sm:$0xff] %v676
      %693 = vst [vmem:[%s262 + $0x8] sm:$0xff] %v677
      %694 = vst [vmem:[%s262 + $0x10] sm:$0xff] %v678
      %695 = vst [vmem:[%s262 + $0x18] sm:$0xff] %v679
      %696 = vst [vmem:[%s262 + $0x20] sm:$0xff] %v680
      %697 = vst [vmem:[%s262 + $0x28] sm:$0xff] %v681
      %698 = vst [vmem:[%s262 + $0x30] sm:$0xff] %v682
      %699 = vst [vmem:[%s262 + $0x38] sm:$0xff] %v683
      %700 = vst [vmem:[%s262 + $0x40] sm:$0xff] %v684
      %701 = vst [vmem:[%s262 + $0x48] sm:$0xff] %v685
      %702 = vst [vmem:[%s262 + $0x50] sm:$0xff] %v686
      %703 = vst [vmem:[%s262 + $0x58] sm:$0xff] %v687
      %704 = vst [vmem:[%s262 + $0x60] sm:$0xff] %v688
      %705 = vst [vmem:[%s262 + $0x68] sm:$0xff] %v689
      %706 = vst [vmem:[%s262 + $0x70] sm:$0xff] %v690
      %707 = vst [vmem:[%s262 + $0x78] sm:$0xff] %v691
      %s708 = smul.u32 2, %s21
      %p709 = scmp.lt.s32.totalorder %s20, 1
      %s710 = scalar_select %p709, %s20, 1
      %p711 = scmp.lt.s32.totalorder %s708, 1
      %s712 = scalar_select %p711, %s708, 1
      %s713 = smul.addr %s710, 16
      %s714 = sadd.s32 %s712, %s713
      %s715 = smul.addr %s714, 8
      %s716 = scalar_lea.vmem %s5, %s715
      // Predicated region
      $region41: #{modulate_forward.1} parent=39 // pred_check
        %p717 = pneg %p160
      $region42: #{modulate_forward.1} parent=39 // pred_check_branch
        %719 = sbr.rel (%p717) target = $region44
      $region43: #{modulate_forward.1} parent=39 // pred_region
        %s720 = smul.u32 2, %s21
      $region44: #{modulate_forward.1} parent=39 // pred_fallthru
        _
    $region40: #{modulate_forward.1} parent=5 // pred_fallthru
      _
    %p721 = scmp.le.s32.totalorder 2, %s11
    // Predicated region
    $region45: #{modulate_forward.1} parent=5 // pred_check
      %p722 = pneg %p721
    $region46: #{modulate_forward.1} parent=5 // pred_check_branch
      %724 = sbr.rel (%p722) target = $region48
    $region47: #{modulate_forward.1} parent=5 // pred_region
      %s725 = ssub.s32 %s11, 2
      // Predicated region
      $region49: #{modulate_forward.1} parent=47 // pred_check
        %p726 = pneg %p166
      $region50: #{modulate_forward.1} parent=47 // pred_check_branch
        %728 = sbr.rel (%p726) target = $region52
      $region51: #{modulate_forward.1} parent=47 // pred_region
        %s729 = smul.u32 2, %s23
        %p730 = scmp.lt.s32.totalorder %s22, 1
        %s731 = scalar_select %p730, %s22, 1
        %p732 = scmp.lt.s32.totalorder %s729, 1
        %s733 = scalar_select %p732, %s729, 1
        %s734 = smul.addr %s731, 16
        %s735 = sadd.s32 %s733, %s734
        %s736 = smul.addr %s735, 8
        %s737 = scalar_lea.vmem %s5, %s736
      $region52: #{modulate_forward.1} parent=47 // pred_fallthru
        _
    $region48: #{modulate_forward.1} parent=5 // pred_fallthru
      _
  $region6: #{modulate_forward.1} parent=0 // loop_footer
    %s15 = sadd.s32 1, %s11
  $region7: #{modulate_forward.1} parent=0 // loop_footer_branch
    %10 = sbr.rel target = $region3
  $region8: #{modulate_forward.1} parent=0 // loop_exit
    _

</llo_original>
